<compile_context>
chip_gen: v6e
topology: v6e:2x2x1
jax: 0.10.0
libtpu: 0.0.40
codegen_flags: <defaults>
</compile_context>

<pallas_src>
import functools

import jax
import jax.numpy as jnp
from jax.experimental import pallas as pl
from jax.experimental.pallas import tpu as pltpu


def _infonce_kernel(x_ref, y_ref, yneg_ref, out_ref, *, inv_tau, block_b, true_b):
    x = x_ref[...].astype(jnp.float32)       # (TB, D)
    y = y_ref[...].astype(jnp.float32)       # (TB, D)
    yn = yneg_ref[...].astype(jnp.float32)   # (TB, K, D)

    # manifold.dist == Euclidean L2 (see TODO above).
    d_pos = jnp.sqrt(jnp.sum((x - y) ** 2, axis=-1, keepdims=True))      # (TB, 1)
    diff = x[:, None, :] - yn                                            # (TB, K, D)
    d_neg = jnp.sqrt(jnp.sum(diff * diff, axis=-1))                      # (TB, K)

    # logits = -dist / tau ; CE(target=0) per row == logsumexp(logits) - logits[0].
    # Fold the positive logit in analytically instead of concatenating into a
    # lane-sparse (TB, 1+K) array.
    l_pos = d_pos * (-inv_tau)                                           # (TB, 1)
    l_neg = d_neg * (-inv_tau)                                           # (TB, K)
    m = jnp.maximum(l_pos, jnp.max(l_neg, axis=-1, keepdims=True))       # (TB, 1)
    denom = jnp.exp(l_pos - m) + jnp.sum(jnp.exp(l_neg - m), axis=-1, keepdims=True)
    loss_row = m + jnp.log(denom) - l_pos                                # (TB, 1)

    # Mask rows that are only batch padding (B rounded up to the tile size).
    tile = pl.program_id(0)
    row = jax.lax.broadcasted_iota(jnp.int32, (block_b, 1), 0) + tile * block_b
    loss_row = jnp.where(row < true_b, loss_row, 0.0)

    # Lane-dense per-tile partial sum; the wrapper finishes the mean.
    out_ref[...] = jnp.full(out_ref.shape, jnp.sum(loss_row), dtype=out_ref.dtype)


def _physical_vmem_bytes():
    try:
        kind = jax.devices()[0].device_kind.lower()
    except Exception:
        kind = ""
    if "v7" in kind or "7x" in kind:
        return 64 * 1024 * 1024        # v7x: 64 MiB per TensorCore
    if "v5" in kind or "v6" in kind:
        return 128 * 1024 * 1024       # v5e / v6e
    return 64 * 1024 * 1024            # unknown: be conservative


def _choose_block_b(batch, k, dim, itemsize, budget_bytes):
    dp = ((dim + 127) // 128) * 128    # last dim is lane-padded to 128 in VMEM
    # Per row: double-buffered streamed inputs (x, y, y_neg) + in-kernel f32
    # upcasts + the (K, D) f32 broadcast-subtract temporary.
    per_row = 2 * (2 + k) * dp * itemsize + (2 + 2 * k) * dp * 4 + 256
    tb = max(8, (budget_bytes // per_row) // 8 * 8)
    b_pad8 = ((batch + 7) // 8) * 8
    return int(min(tb, b_pad8))


def infonce_loss(x, y, y_neg, tau=0.1, *, block_b=None, stream_dtype=jnp.bfloat16):
    """Pallas InfoNCE forward. x, y: (B, D); y_neg: (B*K, D). Returns a scalar."""
    batch, dim = x.shape
    n_neg_total, dim2 = y_neg.shape
    assert dim2 == dim and n_neg_total % batch == 0
    k = n_neg_total // batch

    if stream_dtype is not None:
        x = x.astype(stream_dtype)
        y = y.astype(stream_dtype)
        y_neg = y_neg.astype(stream_dtype)
    y_neg3 = y_neg.reshape(batch, k, dim)

    physical_vmem = _physical_vmem_bytes()
    vmem_limit = physical_vmem // 2               # 64 MiB (v5e/v6e) / 32 MiB (v7x)
    budget = int(vmem_limit * 0.75)               # headroom for pipelining overheads
    tb = block_b if block_b is not None else _choose_block_b(
        batch, k, dim, jnp.dtype(x.dtype).itemsize, budget)
    # TODO(synk): for extreme K*D where even TB=8 exceeds VMEM, chunk the K axis
    # inside the kernel instead of relying on the batch tile alone.

    num_tiles = -(-batch // tb)
    b_pad = num_tiles * tb
    if b_pad != batch:
        pad = b_pad - batch
        x = jnp.pad(x, ((0, pad), (0, 0)))
        y = jnp.pad(y, ((0, pad), (0, 0)))
        y_neg3 = jnp.pad(y_neg3, ((0, pad), (0, 0), (0, 0)))

    kernel = functools.partial(
        _infonce_kernel, inv_tau=1.0 / float(tau), block_b=tb, true_b=batch)

    partials = pl.pallas_call(
        kernel,
        out_shape=jax.ShapeDtypeStruct((num_tiles, 8, 128), jnp.float32),
        grid_spec=pltpu.PrefetchScalarGridSpec(
            num_scalar_prefetch=0,
            grid=(num_tiles,),
            in_specs=[
                pl.BlockSpec((tb, dim), lambda i: (i, 0)),
                pl.BlockSpec((tb, dim), lambda i: (i, 0)),
                pl.BlockSpec((tb, k, dim), lambda i: (i, 0, 0)),
            ],
            out_specs=pl.BlockSpec((1, 8, 128), lambda i: (i, 0, 0)),
        ),
        compiler_params=pltpu.CompilerParams(
            dimension_semantics=("parallel",),
            vmem_limit_bytes=vmem_limit,
        ),
    )(x, y, y_neg3)

    return jnp.sum(partials[:, 0, 0]) / batch


def _infonce_ref(x, y, y_neg, tau=0.1):
    """Pure-JAX reference mirroring the PyTorch forward (Euclidean manifold)."""
    batch = x.shape[0]
    k = y_neg.shape[0] // batch
    d_pos = jnp.linalg.norm(x - y, axis=-1).reshape(-1, 1)
    x_neg = jnp.repeat(x, k, axis=0)
    d_neg = jnp.linalg.norm(x_neg - y_neg, axis=-1).reshape(batch, -1)
    logits = jnp.concatenate([d_pos, d_neg], axis=1) / (-tau)
    logp = jax.nn.log_softmax(logits, axis=1)
    return -jnp.mean(logp[:, 0])


if __name__ == "__main__":
    key = jax.random.PRNGKey(0)
    batch, dim, n_neg_per_sample = 8, 32, 4
    kx, ky, kn = jax.random.split(key, 3)
    x = jax.random.normal(kx, (batch, dim), dtype=jnp.float32)
    y = jax.random.normal(ky, (batch, dim), dtype=jnp.float32)
    y_neg = jax.random.normal(kn, (batch * n_neg_per_sample, dim), dtype=jnp.float32)

    # Full-precision streaming path vs f32 reference.
    loss_f32 = jax.block_until_ready(infonce_loss(x, y, y_neg, tau=0.1, stream_dtype=None))
    ref_f32 = _infonce_ref(x, y, y_neg, tau=0.1)
    assert jnp.allclose(loss_f32, ref_f32, rtol=1e-5, atol=1e-5), (loss_f32, ref_f32)

    # Default bf16-streaming path vs a reference fed identically quantized inputs.
    loss_bf16 = jax.block_until_ready(infonce_loss(x, y, y_neg, tau=0.1))
    xq = x.astype(jnp.bfloat16).astype(jnp.float32)
    yq = y.astype(jnp.bfloat16).astype(jnp.float32)
    ynq = y_neg.astype(jnp.bfloat16).astype(jnp.float32)
    ref_bf16 = _infonce_ref(xq, yq, ynq, tau=0.1)
    assert jnp.allclose(loss_bf16, ref_bf16, rtol=1e-4, atol=1e-4), (loss_bf16, ref_bf16)

    print("KERNEL_OK")
</pallas_src>

<mosaic_0001>
module attributes {stable_mosaic.version = 11 : i64} {
  func.func @_infonce_kernel(%arg0: i32, %arg1: memref<8x32xf32, #tpu.memory_space<vmem>>, %arg2: memref<8x32xf32, #tpu.memory_space<vmem>>, %arg3: memref<8x4x32xf32, #tpu.memory_space<vmem>>, %arg4: memref<1x8x128xf32, #tpu.memory_space<vmem>>) attributes {dimension_semantics = [#tpu.dimension_semantics<parallel>], iteration_bounds = array<i64: 1>, scalar_prefetch = 0 : i64, scratch_operands = 0 : i64, tpu.core_type = #tpu.core_type<tc>, window_params = [{transform_indices = @transform_0, window_bounds = array<i64: 8, 32>}, {transform_indices = @transform_1, window_bounds = array<i64: 8, 32>}, {transform_indices = @transform_2, window_bounds = array<i64: 8, 4, 32>}, {transform_indices = @transform_3, window_bounds = array<i64: 1, 8, 128>}]} {
    %c0 = arith.constant 0 : index
    %c0_0 = arith.constant 0 : index
    %0 = vector.load %arg1[%c0, %c0_0] : memref<8x32xf32, #tpu.memory_space<vmem>>, vector<8x32xf32>
    %c0_1 = arith.constant 0 : index
    %c0_2 = arith.constant 0 : index
    %1 = vector.load %arg2[%c0_1, %c0_2] : memref<8x32xf32, #tpu.memory_space<vmem>>, vector<8x32xf32>
    %c0_3 = arith.constant 0 : index
    %c0_4 = arith.constant 0 : index
    %c0_5 = arith.constant 0 : index
    %2 = vector.load %arg3[%c0_3, %c0_4, %c0_5] : memref<8x4x32xf32, #tpu.memory_space<vmem>>, vector<8x4x32xf32>
    %3 = arith.subf %0, %1 : vector<8x32xf32>
    %4 = arith.mulf %3, %3 : vector<8x32xf32>
    %cst = arith.constant dense<0.000000e+00> : vector<8xf32>
    %5 = vector.multi_reduction <add>, %4, %cst [1] : vector<8x32xf32> to vector<8xf32>
    %6 = vector.shape_cast %5 : vector<8xf32> to vector<8x1xf32>
    %7 = math.sqrt %6 : vector<8x1xf32>
    %8 = vector.shape_cast %0 : vector<8x32xf32> to vector<8x1x32xf32>
    %9 = vector.broadcast %8 : vector<8x1x32xf32> to vector<8x4x32xf32>
    %10 = arith.subf %9, %2 : vector<8x4x32xf32>
    %11 = arith.mulf %10, %10 : vector<8x4x32xf32>
    %cst_6 = arith.constant dense<0.000000e+00> : vector<8x4xf32>
    %12 = vector.multi_reduction <add>, %11, %cst_6 [2] : vector<8x4x32xf32> to vector<8x4xf32>
    %13 = math.sqrt %12 : vector<8x4xf32>
    %cst_7 = arith.constant -1.000000e+01 : f32
    %14 = vector.broadcast %cst_7 : f32 to vector<8x1xf32>
    %15 = arith.mulf %7, %14 : vector<8x1xf32>
    %cst_8 = arith.constant -1.000000e+01 : f32
    %16 = vector.broadcast %cst_8 : f32 to vector<8x4xf32>
    %17 = arith.mulf %13, %16 : vector<8x4xf32>
    %cst_9 = arith.constant dense<0xFF800000> : vector<8xf32>
    %18 = vector.multi_reduction <maximumf>, %17, %cst_9 [1] : vector<8x4xf32> to vector<8xf32>
    %19 = vector.shape_cast %18 : vector<8xf32> to vector<8x1xf32>
    %20 = arith.maximumf %15, %19 : vector<8x1xf32>
    %21 = arith.subf %15, %20 : vector<8x1xf32>
    %22 = math.exp %21 : vector<8x1xf32>
    %23 = vector.broadcast %20 : vector<8x1xf32> to vector<8x4xf32>
    %24 = arith.subf %17, %23 : vector<8x4xf32>
    %25 = math.exp %24 : vector<8x4xf32>
    %cst_10 = arith.constant dense<0.000000e+00> : vector<8xf32>
    %26 = vector.multi_reduction <add>, %25, %cst_10 [1] : vector<8x4xf32> to vector<8xf32>
    %27 = vector.shape_cast %26 : vector<8xf32> to vector<8x1xf32>
    %28 = arith.addf %22, %27 : vector<8x1xf32>
    %29 = math.log %28 : vector<8x1xf32>
    %30 = arith.addf %20, %29 : vector<8x1xf32>
    %31 = arith.subf %30, %15 : vector<8x1xf32>
    %32 = tpu.iota {dimensions = array<i32: 0>} : vector<8x1xi32>
    %c8_i32 = arith.constant 8 : i32
    %33 = arith.muli %arg0, %c8_i32 : i32
    %34 = vector.broadcast %33 : i32 to vector<8x1xi32>
    %35 = arith.addi %32, %34 : vector<8x1xi32>
    %c8_i32_11 = arith.constant 8 : i32
    %36 = vector.broadcast %c8_i32_11 : i32 to vector<8x1xi32>
    %37 = arith.cmpi slt, %35, %36 : vector<8x1xi32>
    %cst_12 = arith.constant 0.000000e+00 : f32
    %38 = vector.broadcast %cst_12 : f32 to vector<8x1xf32>
    %39 = arith.select %37, %31, %38 : vector<8x1xi1>, vector<8x1xf32>
    %40 = vector.shape_cast %39 : vector<8x1xf32> to vector<1x8x1xf32>
    %cst_13 = arith.constant dense<0.000000e+00> : vector<1xf32>
    %41 = vector.multi_reduction <add>, %40, %cst_13 [1, 2] : vector<1x8x1xf32> to vector<1xf32>
    %42 = vector.shape_cast %41 : vector<1xf32> to vector<1x1x1xf32>
    %43 = vector.extract %42[0, 0, 0] : f32 from vector<1x1x1xf32>
    %44 = vector.broadcast %43 : f32 to vector<1x8x128xf32>
    %c0_14 = arith.constant 0 : index
    %c0_15 = arith.constant 0 : index
    %c0_16 = arith.constant 0 : index
    %45 = vector.load %arg4[%c0_14, %c0_15, %c0_16] : memref<1x8x128xf32, #tpu.memory_space<vmem>>, vector<1x8x128xf32>
    tpu.vector_store %arg4[%c0_14, %c0_15, %c0_16], %44 {strides = array<i32>} : memref<1x8x128xf32, #tpu.memory_space<vmem>>, vector<1x8x128xf32>,
    return
  }
  func.func @transform_0(%arg0: i32) -> (i32, i32) {
    %c0_i32 = arith.constant 0 : i32
    %c0_i32_0 = arith.constant 0 : i32
    return %arg0, %c0_i32 : i32, i32
  }
  func.func @transform_1(%arg0: i32) -> (i32, i32) {
    %c0_i32 = arith.constant 0 : i32
    %c0_i32_0 = arith.constant 0 : i32
    return %arg0, %c0_i32 : i32, i32
  }
  func.func @transform_2(%arg0: i32) -> (i32, i32, i32) {
    %c0_i32 = arith.constant 0 : i32
    %c0_i32_0 = arith.constant 0 : i32
    %c0_i32_1 = arith.constant 0 : i32
    return %arg0, %c0_i32, %c0_i32_0 : i32, i32, i32
  }
  func.func @transform_3(%arg0: i32) -> (i32, i32, i32) {
    %c0_i32 = arith.constant 0 : i32
    %c0_i32_0 = arith.constant 0 : i32
    %c0_i32_1 = arith.constant 0 : i32
    return %arg0, %c0_i32, %c0_i32_0 : i32, i32, i32
  }
}

</mosaic_0001>

<llo_original>
// kernel: tpu_custom_call.1
$region0: #{tpu_custom_call.1}
  #allocation0 [shape = 'u32[]', space=smem, size = 0x4, offset = 0x4, fixed_abs, tag = 'smem constant byte address 0x4 - core index']
  #allocation1 [shape = 'u32[144,128]{1,0:T(1,128)}', space=vmem, size = 0x12000, scoped, tag = 'internal scratch']
  %s0 = inlined_call_operand.hbm [shape: f32[8,32], index: 0, kind: input, shape index: {}]
  %s1 = inlined_call_operand.hbm [shape: f32[8,32], index: 1, kind: input, shape index: {}]
  %s2 = inlined_call_operand.hbm [shape: f32[8,4,32], index: 2, kind: input, shape index: {}]
  %s3 = inlined_call_operand.hbm [shape: f32[1,8,128], index: 3, kind: output, shape index: {}]
  %s4 = sld [smem:[#allocation0]]
  $region34: #{tpu_custom_call.1} parent=0
    _
  %s6 = ssub.s32 1, %s4
  %s7 = scalar_select 0, %s6, %s4
  $region1: #{tpu_custom_call.1} parent=0
    #allocation2 [shape = 'u8[4096]{0}', space=vmem, size = 0x1000, scoped, tag = 'input window, operand 0, single buffered']
    #allocation3 [shape = 's32[1]{0}', space=sflag, size = 0x4, scoped, tag = 'scoped memory for tpu_custom_call.1']
    #allocation4 [shape = 's32[1]{0}', space=sflag, size = 0x4, scoped, tag = 'scoped memory for tpu_custom_call.1']
    #allocation5 [shape = 'u8[4096]{0}', space=vmem, size = 0x1000, scoped, tag = 'input window, operand 1, single buffered']
    #allocation6 [shape = 's32[1]{0}', space=sflag, size = 0x4, scoped, tag = 'scoped memory for tpu_custom_call.1']
    #allocation7 [shape = 'u8[16384]{0}', space=vmem, size = 0x4000, scoped, tag = 'input window, operand 2, single buffered']
    #allocation8 [shape = 'u8[4096]{0}', space=vmem, size = 0x1000, scoped, tag = 'output window, operand 0, single buffered']
    %8 = vsyncpa [#allocation3], 0
    %9 = vsyncpa [#allocation6], 0
    %10 = vsyncpa [#allocation4], 0
    // Predicated region
    $region2: #{tpu_custom_call.1} parent=1 // pred_check
      _
    $region3: #{tpu_custom_call.1} parent=1 // pred_check_branch
      %12 = sbr.rel (0) target = $region5
    $region4: #{tpu_custom_call.1} parent=1 // pred_region
      %s14 = ssub.s32 128, 128
      %15 = vsyncadd [#allocation3], %s14
      %s17 = sshll.u32 [#allocation2], 4
      %s18 = int_to_ptr.vmem [resolvable:$true] %s17
      %20 = dma.hbm_to_vmem [thread:$0]  %s0, 128, %s18, [#allocation3]
    $region5: #{tpu_custom_call.1} parent=1 // pred_fallthru
      _
    // Predicated region
    $region6: #{tpu_custom_call.1} parent=1 // pred_check
      _
    $region7: #{tpu_custom_call.1} parent=1 // pred_check_branch
      %22 = sbr.rel (0) target = $region9
    $region8: #{tpu_custom_call.1} parent=1 // pred_region
      %s24 = ssub.s32 128, 128
      %25 = vsyncadd [#allocation6], %s24
      %s27 = sshll.u32 [#allocation5], 4
      %s28 = int_to_ptr.vmem [resolvable:$true] %s27
      %30 = dma.hbm_to_vmem [thread:$0]  %s1, 128, %s28, [#allocation6]
    $region9: #{tpu_custom_call.1} parent=1 // pred_fallthru
      _
    // Predicated region
    $region10: #{tpu_custom_call.1} parent=1 // pred_check
      _
    $region11: #{tpu_custom_call.1} parent=1 // pred_check_branch
      %32 = sbr.rel (0) target = $region13
    $region12: #{tpu_custom_call.1} parent=1 // pred_region
      %s34 = ssub.s32 512, 512
      %35 = vsyncadd [#allocation6], %s34
      %s36 = sshll.u32 [#allocation7], 4
      %s37 = int_to_ptr.vmem [resolvable:$true] %s36
      %42 = dma.hbm_to_vmem [thread:$0]  %s2, 512, %s37, [#allocation6], 64, 64, 4
    $region13: #{tpu_custom_call.1} parent=1 // pred_fallthru
      _
    // Predicated region
    $region14: #{tpu_custom_call.1} parent=1 // pred_check
      _
    $region15: #{tpu_custom_call.1} parent=1 // pred_check_branch
      %44 = sbr.rel (0) target = $region17
    $region16: #{tpu_custom_call.1} parent=1 // pred_region
      %45 = dma.done [#allocation3], 128
    $region17: #{tpu_custom_call.1} parent=1 // pred_fallthru
      _
    // Predicated region
    $region18: #{tpu_custom_call.1} parent=1 // pred_check
      _
    $region19: #{tpu_custom_call.1} parent=1 // pred_check_branch
      %47 = sbr.rel (0) target = $region21
    $region20: #{tpu_custom_call.1} parent=1 // pred_region
      %48 = dma.done [#allocation6], 128
    $region21: #{tpu_custom_call.1} parent=1 // pred_fallthru
      _
    // Predicated region
    $region22: #{tpu_custom_call.1} parent=1 // pred_check
      _
    $region23: #{tpu_custom_call.1} parent=1 // pred_check_branch
      %50 = sbr.rel (0) target = $region25
    $region24: #{tpu_custom_call.1} parent=1 // pred_region
      %51 = dma.done [#allocation6], 512
    $region25: #{tpu_custom_call.1} parent=1 // pred_fallthru
      _
    %v52 = vld [vmem:[#allocation2] sm:$0xff]
    %v53 = vld [vmem:[#allocation5] sm:$0xff]
    %v54 = vld [vmem:[#allocation7] sm:$0xf]
    %v55 = vld [vmem:[#allocation7 + $0x4] sm:$0xf]
    %v56 = vld [vmem:[#allocation7 + $0x8] sm:$0xf]
    %v57 = vld [vmem:[#allocation7 + $0xc] sm:$0xf]
    %v58 = vld [vmem:[#allocation7 + $0x10] sm:$0xf]
    %v59 = vld [vmem:[#allocation7 + $0x14] sm:$0xf]
    %v60 = vld [vmem:[#allocation7 + $0x18] sm:$0xf]
    %v61 = vld [vmem:[#allocation7 + $0x1c] sm:$0xf]
    %v62 = vsub.f32 %v52, %v53
    %v63 = vmul.f32 %v62, %v62
    %vm64 = vcmask 261120
    %v65 = vsel %vm64, %v63, 0.0
    %66 = vadd.xlane.f32.xlu0 %v65
    %v67 = vpop.xlane.xlu0 %66
    %v68 = vrsqrt.pop %v67
    %v69 = vmul.f32 %v67, %v68
    %vm70 = vcmp.eq.f32.partialorder %v67, inf
    %v71 = vsel %vm70, %v67, %v69
    %vm72 = vcmp.eq.f32.partialorder %v67, 0.0
    %v73 = vand.u32 %v67, 2147483648
    %v74 = vsel %vm72, %v73, %v71
    %v76 = vcombine.high %v52, %v52
    %v78 = vunpack.c.l.s4 1966171168
    %v79 = vunpack.c.0.s8 %v78
    %v80 = vlaneseq
    %v81 = vshrl.u32 %v80, 7
    %v82 = vsub.s32 %v79, %v81
    %v83 = vrot.slane %v52, %v82
    %v85 = vunpack.c.l.s4 1966171168
    %v86 = vunpack.c.0.s8 %v85
    %v87 = vlaneseq
    %v88 = vshrl.u32 %v87, 7
    %v89 = vsub.s32 %v86, %v88
    %v90 = vrot.slane %v76, %v89
    %v91 = vcombine.high %v83, %v83
    %v92 = vcombine.high %v90, %v90
    %v94 = vunpack.c.l.s4 1966171168
    %v95 = vunpack.c.0.s8 %v94
    %v96 = vlaneseq
    %v97 = vshrl.u32 %v96, 7
    %v98 = vsub.s32 %v95, %v97
    %v99 = vrot.slane %v83, %v98
    %v101 = vunpack.c.l.s4 1966171168
    %v102 = vunpack.c.0.s8 %v101
    %v103 = vlaneseq
    %v104 = vshrl.u32 %v103, 7
    %v105 = vsub.s32 %v102, %v104
    %v106 = vrot.slane %v90, %v105
    %v108 = vunpack.c.l.s4 1966171168
    %v109 = vunpack.c.0.s8 %v108
    %v110 = vlaneseq
    %v111 = vshrl.u32 %v110, 7
    %v112 = vsub.s32 %v109, %v111
    %v113 = vrot.slane %v91, %v112
    %v115 = vunpack.c.l.s4 1966171168
    %v116 = vunpack.c.0.s8 %v115
    %v117 = vlaneseq
    %v118 = vshrl.u32 %v117, 7
    %v119 = vsub.s32 %v116, %v118
    %v120 = vrot.slane %v92, %v119
    %v121 = vcombine.high %v99, %v99
    %v122 = vcombine.high %v106, %v106
    %v123 = vcombine.high %v113, %v113
    %v124 = vcombine.high %v120, %v120
    %v125 = vlaneseq
    %v126 = vshrl.u32 %v125, 7
    %v127 = vsub.s32 0, %v126
    %v128 = vrot.slane %v99, %v127
    %v129 = vlaneseq
    %v130 = vshrl.u32 %v129, 7
    %v131 = vsub.s32 0, %v130
    %v132 = vrot.slane %v113, %v131
    %v133 = vlaneseq
    %v134 = vshrl.u32 %v133, 7
    %v135 = vsub.s32 0, %v134
    %v136 = vrot.slane %v121, %v135
    %v137 = vlaneseq
    %v138 = vshrl.u32 %v137, 7
    %v139 = vsub.s32 0, %v138
    %v140 = vrot.slane %v123, %v139
    %v141 = vlaneseq
    %v142 = vshrl.u32 %v141, 7
    %v143 = vsub.s32 0, %v142
    %v144 = vrot.slane %v106, %v143
    %v145 = vlaneseq
    %v146 = vshrl.u32 %v145, 7
    %v147 = vsub.s32 0, %v146
    %v148 = vrot.slane %v120, %v147
    %v149 = vlaneseq
    %v150 = vshrl.u32 %v149, 7
    %v151 = vsub.s32 0, %v150
    %v152 = vrot.slane %v122, %v151
    %v153 = vlaneseq
    %v154 = vshrl.u32 %v153, 7
    %v155 = vsub.s32 0, %v154
    %v156 = vrot.slane %v124, %v155
    %v165 = vsub.f32 %v128, %v54
    %v166 = vsub.f32 %v132, %v55
    %v167 = vsub.f32 %v136, %v56
    %v168 = vsub.f32 %v140, %v57
    %v169 = vsub.f32 %v144, %v58
    %v170 = vsub.f32 %v148, %v59
    %v171 = vsub.f32 %v152, %v60
    %v172 = vsub.f32 %v156, %v61
    %v173 = vmul.f32 %v165, %v165
    %v174 = vmul.f32 %v166, %v166
    %v175 = vmul.f32 %v167, %v167
    %v176 = vmul.f32 %v168, %v168
    %v177 = vmul.f32 %v169, %v169
    %v178 = vmul.f32 %v170, %v170
    %v179 = vmul.f32 %v171, %v171
    %v180 = vmul.f32 %v172, %v172
    %vm181 = vcmask 257024
    %v182 = vsel %vm181, %v173, 0.0
    %183 = vadd.xlane.f32.xlu0 %v182
    %v184 = vpop.xlane.xlu0 %183
    %v185 = vsel %vm181, %v174, 0.0
    %186 = vadd.xlane.f32.xlu0 %v185
    %v187 = vpop.xlane.xlu0 %186
    %v188 = vsel %vm181, %v175, 0.0
    %189 = vadd.xlane.f32.xlu0 %v188
    %v190 = vpop.xlane.xlu0 %189
    %v191 = vsel %vm181, %v176, 0.0
    %192 = vadd.xlane.f32.xlu0 %v191
    %v193 = vpop.xlane.xlu0 %192
    %v194 = vsel %vm181, %v177, 0.0
    %195 = vadd.xlane.f32.xlu0 %v194
    %v196 = vpop.xlane.xlu0 %195
    %v197 = vsel %vm181, %v178, 0.0
    %198 = vadd.xlane.f32.xlu0 %v197
    %v199 = vpop.xlane.xlu0 %198
    %v200 = vsel %vm181, %v179, 0.0
    %201 = vadd.xlane.f32.xlu0 %v200
    %v202 = vpop.xlane.xlu0 %201
    %v203 = vsel %vm181, %v180, 0.0
    %204 = vadd.xlane.f32.xlu0 %v203
    %v205 = vpop.xlane.xlu0 %204
    %v206 = vrsqrt.pop %v184
    %v207 = vmul.f32 %v184, %v206
    %vm208 = vcmp.eq.f32.partialorder %v184, inf
    %v209 = vsel %vm208, %v184, %v207
    %vm210 = vcmp.eq.f32.partialorder %v184, 0.0
    %v211 = vand.u32 %v184, 2147483648
    %v212 = vsel %vm210, %v211, %v209
    %v213 = vrsqrt.pop %v187
    %v214 = vmul.f32 %v187, %v213
    %vm215 = vcmp.eq.f32.partialorder %v187, inf
    %v216 = vsel %vm215, %v187, %v214
    %vm217 = vcmp.eq.f32.partialorder %v187, 0.0
    %v218 = vand.u32 %v187, 2147483648
    %v219 = vsel %vm217, %v218, %v216
    %v220 = vrsqrt.pop %v190
    %v221 = vmul.f32 %v190, %v220
    %vm222 = vcmp.eq.f32.partialorder %v190, inf
    %v223 = vsel %vm222, %v190, %v221
    %vm224 = vcmp.eq.f32.partialorder %v190, 0.0
    %v225 = vand.u32 %v190, 2147483648
    %v226 = vsel %vm224, %v225, %v223
    %v227 = vrsqrt.pop %v193
    %v228 = vmul.f32 %v193, %v227
    %vm229 = vcmp.eq.f32.partialorder %v193, inf
    %v230 = vsel %vm229, %v193, %v228
    %vm231 = vcmp.eq.f32.partialorder %v193, 0.0
    %v232 = vand.u32 %v193, 2147483648
    %v233 = vsel %vm231, %v232, %v230
    %v234 = vrsqrt.pop %v196
    %v235 = vmul.f32 %v196, %v234
    %vm236 = vcmp.eq.f32.partialorder %v196, inf
    %v237 = vsel %vm236, %v196, %v235
    %vm238 = vcmp.eq.f32.partialorder %v196, 0.0
    %v239 = vand.u32 %v196, 2147483648
    %v240 = vsel %vm238, %v239, %v237
    %v241 = vrsqrt.pop %v199
    %v242 = vmul.f32 %v199, %v241
    %vm243 = vcmp.eq.f32.partialorder %v199, inf
    %v244 = vsel %vm243, %v199, %v242
    %vm245 = vcmp.eq.f32.partialorder %v199, 0.0
    %v246 = vand.u32 %v199, 2147483648
    %v247 = vsel %vm245, %v246, %v244
    %v248 = vrsqrt.pop %v202
    %v249 = vmul.f32 %v202, %v248
    %vm250 = vcmp.eq.f32.partialorder %v202, inf
    %v251 = vsel %vm250, %v202, %v249
    %vm252 = vcmp.eq.f32.partialorder %v202, 0.0
    %v253 = vand.u32 %v202, 2147483648
    %v254 = vsel %vm252, %v253, %v251
    %v255 = vrsqrt.pop %v205
    %v256 = vmul.f32 %v205, %v255
    %vm257 = vcmp.eq.f32.partialorder %v205, inf
    %v258 = vsel %vm257, %v205, %v256
    %vm259 = vcmp.eq.f32.partialorder %v205, 0.0
    %v260 = vand.u32 %v205, 2147483648
    %v261 = vsel %vm259, %v260, %v258
    %v262 = vmul.f32 %v74, -10.0
    %v263 = vmul.f32 %v212, -10.0
    %v264 = vmul.f32 %v219, -10.0
    %v265 = vmul.f32 %v226, -10.0
    %v266 = vmul.f32 %v233, -10.0
    %v267 = vmul.f32 %v240, -10.0
    %v268 = vmul.f32 %v247, -10.0
    %v269 = vmul.f32 %v254, -10.0
    %v270 = vmul.f32 %v261, -10.0
    %v279 = vlaneseq
    %v280 = vand.u32 %v279, 127
    %v281 = vlaneseq
    %v282 = vshrl.u32 %v281, 7
    %v283 = vsub.s32 %v280, %v282
    %v284 = vrot.slane %v263, %v283
    %v285 = vlaneseq
    %v286 = vshrl.u32 %v285, 7
    %v287 = vsub.s32 %v280, %v286
    %v288 = vrot.slane %v264, %v287
    %v289 = vlaneseq
    %v290 = vshrl.u32 %v289, 7
    %v291 = vsub.s32 %v280, %v290
    %v292 = vrot.slane %v265, %v291
    %v293 = vlaneseq
    %v294 = vshrl.u32 %v293, 7
    %v295 = vsub.s32 %v280, %v294
    %v296 = vrot.slane %v266, %v295
    %v297 = vlaneseq
    %v298 = vshrl.u32 %v297, 7
    %v299 = vsub.s32 %v280, %v298
    %v300 = vrot.slane %v267, %v299
    %v301 = vlaneseq
    %v302 = vshrl.u32 %v301, 7
    %v303 = vsub.s32 %v280, %v302
    %v304 = vrot.slane %v268, %v303
    %v305 = vlaneseq
    %v306 = vshrl.u32 %v305, 7
    %v307 = vsub.s32 %v280, %v306
    %v308 = vrot.slane %v269, %v307
    %v309 = vlaneseq
    %v310 = vshrl.u32 %v309, 7
    %v311 = vsub.s32 %v280, %v310
    %v312 = vrot.slane %v270, %v311
    %vm313 = vcmask 1041409
    %v314 = vsel %vm313, %v288, %v284
    %vm315 = vcmask 1042434
    %v316 = vsel %vm315, %v292, %v314
    %vm317 = vcmask 1043459
    %v318 = vsel %vm317, %v296, %v316
    %vm319 = vcmask 1044484
    %v320 = vsel %vm319, %v300, %v318
    %vm321 = vcmask 1045509
    %v322 = vsel %vm321, %v304, %v320
    %vm323 = vcmask 1046534
    %v324 = vsel %vm323, %v308, %v322
    %vm325 = vcmask 1047559
    %v326 = vsel %vm325, %v312, %v324
    %vm328 = vcmask 31744
    %v329 = vsel %vm328, %v326, -inf
    %330 = vmax.xlane.f32.xlu0 %v329
    %v331 = vpop.xlane.xlu0 %330
    %v332 = vmax.f32 %v262, %v331
    %v333 = vsub.f32 %v262, %v332
    %v334 = vmul.f32 %v333, 1.442695
    %v335 = vpow.pop %v334
    %v337 = vlaneseq
    %v338 = vshrl.u32 %v337, 7
    %v339 = vsub.s32 0, %v338
    %v340 = vrot.slane %v332, %v339
    %v341 = vlaneseq
    %v342 = vshrl.u32 %v341, 7
    %v343 = vsub.s32 1, %v342
    %v344 = vrot.slane %v332, %v343
    %v345 = vlaneseq
    %v346 = vshrl.u32 %v345, 7
    %v347 = vsub.s32 2, %v346
    %v348 = vrot.slane %v332, %v347
    %v349 = vlaneseq
    %v350 = vshrl.u32 %v349, 7
    %v351 = vsub.s32 3, %v350
    %v352 = vrot.slane %v332, %v351
    %v353 = vlaneseq
    %v354 = vshrl.u32 %v353, 7
    %v355 = vsub.s32 4, %v354
    %v356 = vrot.slane %v332, %v355
    %v357 = vlaneseq
    %v358 = vshrl.u32 %v357, 7
    %v359 = vsub.s32 5, %v358
    %v360 = vrot.slane %v332, %v359
    %v361 = vlaneseq
    %v362 = vshrl.u32 %v361, 7
    %v363 = vsub.s32 6, %v362
    %v364 = vrot.slane %v332, %v363
    %v365 = vlaneseq
    %v366 = vshrl.u32 %v365, 7
    %v367 = vsub.s32 7, %v366
    %v368 = vrot.slane %v332, %v367
    %v377 = vsub.f32 %v263, %v340
    %v378 = vsub.f32 %v264, %v344
    %v379 = vsub.f32 %v265, %v348
    %v380 = vsub.f32 %v266, %v352
    %v381 = vsub.f32 %v267, %v356
    %v382 = vsub.f32 %v268, %v360
    %v383 = vsub.f32 %v269, %v364
    %v384 = vsub.f32 %v270, %v368
    %v385 = vmul.f32 %v377, 1.442695
    %v386 = vpow.pop %v385
    %v387 = vmul.f32 %v378, 1.442695
    %v388 = vpow.pop %v387
    %v389 = vmul.f32 %v379, 1.442695
    %v390 = vpow.pop %v389
    %v391 = vmul.f32 %v380, 1.442695
    %v392 = vpow.pop %v391
    %v393 = vmul.f32 %v381, 1.442695
    %v394 = vpow.pop %v393
    %v395 = vmul.f32 %v382, 1.442695
    %v396 = vpow.pop %v395
    %v397 = vmul.f32 %v383, 1.442695
    %v398 = vpow.pop %v397
    %v399 = vmul.f32 %v384, 1.442695
    %v400 = vpow.pop %v399
    %409 = vset.pattern.permute.xlu0 0
    %410 = vperm.xlu0 %409, %v386
    %v411 = vpop.permute.xlu0 %410
    %412 = vset.pattern.permute.xlu0 0
    %413 = vperm.xlu0 %412, %v388
    %v414 = vpop.permute.xlu0 %413
    %415 = vset.pattern.permute.xlu0 0
    %416 = vperm.xlu0 %415, %v390
    %v417 = vpop.permute.xlu0 %416
    %418 = vset.pattern.permute.xlu0 0
    %419 = vperm.xlu0 %418, %v392
    %v420 = vpop.permute.xlu0 %419
    %421 = vset.pattern.permute.xlu0 0
    %422 = vperm.xlu0 %421, %v394
    %v423 = vpop.permute.xlu0 %422
    %424 = vset.pattern.permute.xlu0 0
    %425 = vperm.xlu0 %424, %v396
    %v426 = vpop.permute.xlu0 %425
    %427 = vset.pattern.permute.xlu0 0
    %428 = vperm.xlu0 %427, %v398
    %v429 = vpop.permute.xlu0 %428
    %430 = vset.pattern.permute.xlu0 0
    %431 = vperm.xlu0 %430, %v400
    %v432 = vpop.permute.xlu0 %431
    %v433 = vlaneseq
    %v434 = vshrl.u32 %v433, 7
    %v435 = vsub.s32 %v280, %v434
    %v436 = vrot.slane %v411, %v435
    %v437 = vlaneseq
    %v438 = vshrl.u32 %v437, 7
    %v439 = vsub.s32 %v280, %v438
    %v440 = vrot.slane %v414, %v439
    %v441 = vlaneseq
    %v442 = vshrl.u32 %v441, 7
    %v443 = vsub.s32 %v280, %v442
    %v444 = vrot.slane %v417, %v443
    %v445 = vlaneseq
    %v446 = vshrl.u32 %v445, 7
    %v447 = vsub.s32 %v280, %v446
    %v448 = vrot.slane %v420, %v447
    %v449 = vlaneseq
    %v450 = vshrl.u32 %v449, 7
    %v451 = vsub.s32 %v280, %v450
    %v452 = vrot.slane %v423, %v451
    %v453 = vlaneseq
    %v454 = vshrl.u32 %v453, 7
    %v455 = vsub.s32 %v280, %v454
    %v456 = vrot.slane %v426, %v455
    %v457 = vlaneseq
    %v458 = vshrl.u32 %v457, 7
    %v459 = vsub.s32 %v280, %v458
    %v460 = vrot.slane %v429, %v459
    %v461 = vlaneseq
    %v462 = vshrl.u32 %v461, 7
    %v463 = vsub.s32 %v280, %v462
    %v464 = vrot.slane %v432, %v463
    %v465 = vsel %vm313, %v440, %v436
    %v466 = vsel %vm315, %v444, %v465
    %v467 = vsel %vm317, %v448, %v466
    %v468 = vsel %vm319, %v452, %v467
    %v469 = vsel %vm321, %v456, %v468
    %v470 = vsel %vm323, %v460, %v469
    %v471 = vsel %vm325, %v464, %v470
    %v473 = vsel %vm328, %v471, 0.0
    %474 = vadd.xlane.f32.xlu0 %v473
    %v475 = vpop.xlane.xlu0 %474
    %v476 = vadd.f32 %v335, %v475
    %v477 = vlog2.pop %v476
    %v478 = vmul.f32 %v477, 0.6931472
    %v479 = vadd.f32 %v332, %v478
    %v480 = vsub.f32 %v479, %v262
    %v481 = vlaneseq
    %v482 = vshrl.u32 %v481, 7
    %s483 = smul.u32 0, 8
    %v484 = vstv %s483
    %v485 = vadd.s32 %v482, %v484
    %vm486 = vcmp.lt.s32.totalorder %v485, 8
    %v487 = vsel %vm486, %v480, 0.0
    %vm488 = vcmask 7168
    %v489 = vsel %vm488, %v487, 0.0
    %490 = vadd.xlane.f32.xlu0 %v489
    %v491 = vpop.xlane.xlu0 %490
    %v492 = vrot.slane %v491, 4
    %v493 = vadd.f32 %v491, %v492
    %v494 = vrot.slane %v493, 2
    %v495 = vadd.f32 %v493, %v494
    %v496 = vrot.slane %v495, 1
    %v497 = vadd.f32 %v495, %v496
    %s498 = vtos %v497
    %v499 = vstv %s498
    %500 = vst [vmem:[#allocation8] sm:$0xff] %v499
    // Predicated region
    $region26: #{tpu_custom_call.1} parent=1 // pred_check
      _
    $region27: #{tpu_custom_call.1} parent=1 // pred_check_branch
      %502 = sbr.rel (0) target = $region29
    $region28: #{tpu_custom_call.1} parent=1 // pred_region
      %s504 = ssub.s32 128, 128
      %505 = vsyncadd [#allocation4], %s504
      %s507 = sshll.u32 [#allocation8], 4
      %s508 = int_to_ptr.vmem [resolvable:$true] %s507
      %510 = dma.vmem_to_hbm [thread:$0]  %s508, 128, %s3, [#allocation4]
    $region29: #{tpu_custom_call.1} parent=1 // pred_fallthru
      _
    // Predicated region
    $region30: #{tpu_custom_call.1} parent=1 // pred_check
      _
    $region31: #{tpu_custom_call.1} parent=1 // pred_check_branch
      %512 = sbr.rel (0) target = $region33
    $region32: #{tpu_custom_call.1} parent=1 // pred_region
      %513 = dma.done [#allocation4], 128
    $region33: #{tpu_custom_call.1} parent=1 // pred_fallthru
      _
    %514 = vsyncpa [#allocation3], 1
    %515 = vsyncpa [#allocation6], 1
    %516 = vsyncpa [#allocation4], 1

</llo_original>
